<compile_context>
chip_gen: v5e
topology: v5e:2x2
jax: 0.10.0
libtpu: 0.0.40
codegen_flags: <defaults>
</compile_context>

<pallas_src>
import functools

import jax
import jax.numpy as jnp
import numpy as np
from jax.experimental import pallas as pl
from jax.experimental.pallas import tpu as pltpu


def _round_up(x, k):
    return (x + k - 1) // k * k


# ---------------------------------------------------------------------------
# Kernels
# ---------------------------------------------------------------------------
def _time_encode_packed_kernel(t_ref, p_ref, w_ref, b_ref, o_ref):
    """Lane-dense packed kernel.

    t_ref: (3r, TM) bf16 - exact 3-way bf16 split of t, packed-row index on lanes
    p_ref: (3r, 128) bf16 - constant 0/1 selection matrix (lane // dim == j)
    w_ref: (1, 128)  f32  - W^T tiled r times along lanes
    b_ref: (1, 128)  f32  - bias tiled the same way
    o_ref: (TM, 128)      - row-major view of (TM*r, dim)
    """
    # MXU: expands each timestamp across its dim-wide lane group and sums the
    # three exact bf16 parts back into the original f32 value (all products are
    # bf16 * {0,1} and the f32 accumulation of hi+mid+lo is exact), so t_exp is
    # bit-identical to the f32 timestamps.  This keeps the VALU slot free for
    # the cos polynomial, which is the binding unit on v6e/v7x.
    t_exp = jax.lax.dot_general(
        t_ref[...], p_ref[...],
        dimension_numbers=(((0,), (0,)), ((), ())),   # contract sublane axes
        preferred_element_type=jnp.float32,
    )                                                  # (TM, 128) f32
    phase = t_exp * w_ref[...] + b_ref[...]            # f32 on the VPU (exact)
    o_ref[...] = jnp.cos(phase).astype(o_ref.dtype)


def _time_encode_rows_kernel(t_ref, w_ref, b_ref, o_ref):
    # Row layout: t_ref (TN, 1), w_ref/b_ref (1, dim), o_ref (TN, dim).
    # Used for dims that do not divide 128 and for the < r-element ragged tail.
    o_ref[...] = jnp.cos(t_ref[...] * w_ref[...] + b_ref[...]).astype(o_ref.dtype)


# ---------------------------------------------------------------------------
# Helpers
# ---------------------------------------------------------------------------
def _split3_bf16_exact(x):
    """Exact 3-way bf16 split of f32 x by mantissa truncation: hi+mid+lo == x."""
    mask = np.uint32(0xFFFF0000)

    def trunc_to_bf16(v):
        u = jax.lax.bitcast_convert_type(v, jnp.uint32)
        return jax.lax.bitcast_convert_type(u & mask, jnp.float32)

    hi = trunc_to_bf16(x)          # top 8 significant bits, exactly bf16
    rem = x - hi                   # exact in f32 (<= 16 significant bits)
    mid = trunc_to_bf16(rem)       # next 8 bits, exactly bf16
    lo = rem - mid                 # exact, <= 8 significant bits -> exactly bf16
    return hi, mid, lo


def _packed_call(t_main, w, b, *, dim, r, block_rows, out_dtype):
    """Packed lane-dense path; len(t_main) must be a multiple of r = 128 // dim."""
    n_main = t_main.shape[0]
    m = n_main // r                                    # packed output rows

    # Exact 3-way bf16 split, arranged as (3r, m): row s*r + j = part_s(t[i*r+j])
    # at lane i.  Lane-dense input block -> contiguous DMA rows, tiny VMEM.
    hi, mid, lo = _split3_bf16_exact(t_main)
    t_split = (jnp.stack([hi, mid, lo], axis=0)        # (3, n_main)
               .reshape(3, m, r)
               .transpose(0, 2, 1)                     # (3, r, m)
               .reshape(3 * r, m)
               .astype(jnp.bfloat16))

    # Constant 0/1 selection matrix: P[s*r + j, lane] = (lane // dim == j).
    sel = np.arange(128) // dim
    p_np = np.zeros((3 * r, 128), np.float32)
    for s in range(3):
        for j in range(r):
            p_np[s * r + j] = (sel == j)
    p_mat = jnp.asarray(p_np, dtype=jnp.bfloat16)

    w_row = jnp.tile(w.reshape(1, dim).astype(jnp.float32), (1, r))   # (1, 128)
    b_row = jnp.tile(b.reshape(1, dim).astype(jnp.float32), (1, r))   # (1, 128)

    # Tile sizing: single step for tiny problems (per-step overhead dominates),
    # otherwise a multiple-of-128 tile aimed at >= 8 grid steps so the v7x
    # 2-TensorCore parallel split stays balanced, capped by block_rows (VMEM).
    if m <= 1024:
        tm = m
    else:
        tm = min(block_rows, max(1024, _round_up(pl.cdiv(m, 8), 128)))
        tm = _round_up(tm, 128)
    grid = (pl.cdiv(m, tm),)

    out = pl.pallas_call(
        _time_encode_packed_kernel,
        out_shape=jax.ShapeDtypeStruct((m, 128), out_dtype),
        grid_spec=pltpu.PrefetchScalarGridSpec(
            num_scalar_prefetch=0,
            grid=grid,
            in_specs=[
                pl.BlockSpec((3 * r, tm), lambda i: (0, i)),    # split t (lane-dense)
                pl.BlockSpec((3 * r, 128), lambda i: (0, 0)),   # selection matrix
                pl.BlockSpec((1, 128), lambda i: (0, 0)),       # tiled weights
                pl.BlockSpec((1, 128), lambda i: (0, 0)),       # tiled bias
            ],
            out_specs=pl.BlockSpec((tm, 128), lambda i: (i, 0)),
        ),
        compiler_params=pltpu.CompilerParams(
            dimension_semantics=("parallel",),
            vmem_limit_bytes=32 * 1024 * 1024,
        ),
    )(t_split, p_mat, w_row, b_row)

    return out.reshape(n_main, dim)                    # free row-major reinterpretation


def _rows_call(t_rows, w, b, *, dim, out_dtype):
    """Row-layout path: dims that do not divide 128, and the ragged tail."""
    n = t_rows.shape[0]
    t_col = t_rows.reshape(n, 1)
    w_row = w.reshape(1, dim).astype(jnp.float32)
    b_row = b.reshape(1, dim).astype(jnp.float32)

    # ~4 MiB output block, multiple of 16 rows (bf16-safe tiling).
    max_rows = max(16, ((4 * 1024 * 1024) // (dim * 4)) // 16 * 16)
    tile_n = n if n <= max_rows else max_rows
    grid = (pl.cdiv(n, tile_n),)

    out = pl.pallas_call(
        _time_encode_rows_kernel,
        out_shape=jax.ShapeDtypeStruct((n, dim), out_dtype),
        grid_spec=pltpu.PrefetchScalarGridSpec(
            num_scalar_prefetch=0,
            grid=grid,
            in_specs=[
                pl.BlockSpec((tile_n, 1), lambda i: (i, 0)),
                pl.BlockSpec((1, dim), lambda i: (0, 0)),
                pl.BlockSpec((1, dim), lambda i: (0, 0)),
            ],
            out_specs=pl.BlockSpec((tile_n, dim), lambda i: (i, 0)),
        ),
        compiler_params=pltpu.CompilerParams(
            dimension_semantics=("parallel",),
            vmem_limit_bytes=32 * 1024 * 1024,
        ),
    )(t_col, w_row, b_row)
    return out


# ---------------------------------------------------------------------------
# Public entry point
# ---------------------------------------------------------------------------
@functools.partial(jax.jit, static_argnames=("dim", "block_rows", "out_dtype"))
def time_encode(t, w, b, *, dim, block_rows=8192, out_dtype=jnp.float32):
    """TimeEncode forward.  t: any-shaped float array; w: (dim, 1); b: (dim,)."""
    if w.shape != (dim, 1):
        raise ValueError(f"w must have shape ({dim}, 1), got {w.shape}")
    if b.shape != (dim,):
        raise ValueError(f"b must have shape ({dim},), got {b.shape}")

    orig_shape = t.shape
    t_flat = t.reshape(-1).astype(jnp.float32)
    n = t_flat.shape[0]
    if n == 0:
        return jnp.zeros((*orig_shape, dim), out_dtype)

    if 0 < dim <= 128 and 128 % dim == 0:
        r = 128 // dim                       # timestamps per packed 128-lane row
        n_main = (n // r) * r                # aligned prefix handled packed
        pieces = []
        if n_main > 0:
            pieces.append(_packed_call(t_flat[:n_main], w, b, dim=dim, r=r,
                                       block_rows=block_rows, out_dtype=out_dtype))
        if n_main < n:
            # Ragged tail (< r timestamps): tiny rows-kernel call, no padded slab.
            pieces.append(_rows_call(t_flat[n_main:], w, b, dim=dim,
                                     out_dtype=out_dtype))
        out = pieces[0] if len(pieces) == 1 else jnp.concatenate(pieces, axis=0)
        return out.reshape(*orig_shape, dim)

    # dim does not divide 128 (e.g. TGN's default time_dim=100): row layout.
    # Output block last dim < 128 -> masked stores; acceptable fallback.
    out = _rows_call(t_flat, w, b, dim=dim, out_dtype=out_dtype)
    return out.reshape(*orig_shape, dim)


def make_time_encode_params(dim):
    """Deterministic init matching TimeEncode.__init__."""
    w = (1.0 / 10.0 ** np.linspace(0, 9, dim)).astype(np.float32).reshape(dim, 1)
    b = np.zeros((dim,), dtype=np.float32)
    return jnp.asarray(w), jnp.asarray(b)


# ---------------------------------------------------------------------------
# Self-test
# ---------------------------------------------------------------------------
if __name__ == "__main__":
    dim = 32
    batch, seq = 2, 8

    key = jax.random.PRNGKey(0)
    k1, k2, k3, k4 = jax.random.split(key, 4)
    w, b = make_time_encode_params(dim)

    def reference(tt, ww, bb):
        return jnp.cos(tt[..., None] * ww.reshape(-1) + bb)

    # (1) TGN-scale timestamps (~1e4).  The f32 phase t*w is only representable
    #     to ~1e-3 absolute at |phase| ~ 1e4, so cos outputs from any two
    #     correct f32 pipelines can differ at that level; 2e-3 still catches
    #     packing/layout/precision bugs, which show up as O(1) errors.
    t1 = jax.random.uniform(k1, (batch, seq), jnp.float32, 0.0, 1e4)
    out1 = jax.block_until_ready(time_encode(t1, w, b, dim=dim))
    assert out1.shape == (batch, seq, dim), out1.shape
    np.testing.assert_allclose(np.asarray(out1), np.asarray(reference(t1, w, b)),
                               rtol=0.0, atol=2e-3)

    # (2) Moderate timestamps: the kernel's phase is bit-exact f32 (exact 3-way
    #     bf16 split on the MXU), so only cos-implementation ULP differences
    #     remain -> tight tolerance.
    t2 = jax.random.uniform(k2, (batch, seq), jnp.float32, 0.0, 32.0)
    out2 = jax.block_until_ready(time_encode(t2, w, b, dim=dim))
    np.testing.assert_allclose(np.asarray(out2), np.asarray(reference(t2, w, b)),
                               rtol=0.0, atol=1e-4)

    # (3) Larger ragged N: multi-step grid on the packed path + rows-kernel tail.
    n3 = 4 * 2500 + 3
    t3 = jax.random.uniform(k3, (n3,), jnp.float32, 0.0, 1e4)
    out3 = jax.block_until_ready(time_encode(t3, w, b, dim=dim))
    np.testing.assert_allclose(np.asarray(out3), np.asarray(reference(t3, w, b)),
                               rtol=0.0, atol=2e-3)

    # (4) bf16 output (halves the HBM writeback stream); math stays f32.
    out4 = jax.block_until_ready(
        time_encode(t2, w, b, dim=dim, out_dtype=jnp.bfloat16))
    np.testing.assert_allclose(np.asarray(out4.astype(jnp.float32)),
                               np.asarray(reference(t2, w, b)),
                               rtol=0.0, atol=5e-3)

    # (5) dim that does not divide 128 (TGN default time_dim=100): fallback path.
    dim5 = 100
    w5, b5 = make_time_encode_params(dim5)
    t5 = jax.random.uniform(k4, (7,), jnp.float32, 0.0, 1e4)
    out5 = jax.block_until_ready(time_encode(t5, w5, b5, dim=dim5))
    np.testing.assert_allclose(np.asarray(out5), np.asarray(reference(t5, w5, b5)),
                               rtol=0.0, atol=2e-3)

    print("KERNEL_OK")
</pallas_src>

<mosaic_0001>
module attributes {stable_mosaic.version = 11 : i64} {
  func.func @_time_encode_packed_kernel(%arg0: i32, %arg1: memref<12x4xbf16, #tpu.memory_space<vmem>>, %arg2: memref<12x128xbf16, #tpu.memory_space<vmem>>, %arg3: memref<1x128xf32, #tpu.memory_space<vmem>>, %arg4: memref<1x128xf32, #tpu.memory_space<vmem>>, %arg5: memref<4x128xf32, #tpu.memory_space<vmem>>) attributes {dimension_semantics = [#tpu.dimension_semantics<parallel>], iteration_bounds = array<i64: 1>, scalar_prefetch = 0 : i64, scratch_operands = 0 : i64, tpu.core_type = #tpu.core_type<tc>, window_params = [{transform_indices = @transform_0, window_bounds = array<i64: 12, 4>}, {pipeline_mode = #tpu.pipeline_mode<synchronous>, transform_indices = @transform_1, window_bounds = array<i64: 12, 128>}, {pipeline_mode = #tpu.pipeline_mode<synchronous>, transform_indices = @transform_2, window_bounds = array<i64: 1, 128>}, {pipeline_mode = #tpu.pipeline_mode<synchronous>, transform_indices = @transform_3, window_bounds = array<i64: 1, 128>}, {transform_indices = @transform_4, window_bounds = array<i64: 4, 128>}]} {
    %c0 = arith.constant 0 : index
    %c0_0 = arith.constant 0 : index
    %0 = vector.load %arg1[%c0, %c0_0] : memref<12x4xbf16, #tpu.memory_space<vmem>>, vector<12x4xbf16>
    %c0_1 = arith.constant 0 : index
    %c0_2 = arith.constant 0 : index
    %1 = vector.load %arg2[%c0_1, %c0_2] : memref<12x128xbf16, #tpu.memory_space<vmem>>, vector<12x128xbf16>
    %cst = arith.constant dense<0.000000e+00> : vector<4x128xf32>
    %2 = tpu.matmul %0, %1, %cst {dimension_numbers = #tpu.dot_dimension_numbers<[0], [0], [1], [1], [0, 1, 1, 1], [], []>} : vector<12x4xbf16>, vector<12x128xbf16>, vector<4x128xf32> -> vector<4x128xf32>
    %c0_3 = arith.constant 0 : index
    %c0_4 = arith.constant 0 : index
    %3 = vector.load %arg3[%c0_3, %c0_4] : memref<1x128xf32, #tpu.memory_space<vmem>>, vector<1x128xf32>
    %4 = vector.broadcast %3 : vector<1x128xf32> to vector<4x128xf32>
    %5 = arith.mulf %2, %4 : vector<4x128xf32>
    %c0_5 = arith.constant 0 : index
    %c0_6 = arith.constant 0 : index
    %6 = vector.load %arg4[%c0_5, %c0_6] : memref<1x128xf32, #tpu.memory_space<vmem>>, vector<1x128xf32>
    %7 = vector.broadcast %6 : vector<1x128xf32> to vector<4x128xf32>
    %8 = arith.addf %5, %7 : vector<4x128xf32>
    %9 = math.cos %8 : vector<4x128xf32>
    %c0_7 = arith.constant 0 : index
    %c0_8 = arith.constant 0 : index
    %10 = vector.load %arg5[%c0_7, %c0_8] : memref<4x128xf32, #tpu.memory_space<vmem>>, vector<4x128xf32>
    tpu.vector_store %arg5[%c0_7, %c0_8], %9 {strides = array<i32>} : memref<4x128xf32, #tpu.memory_space<vmem>>, vector<4x128xf32>,
    return
  }
  func.func @transform_0(%arg0: i32) -> (i32, i32) {
    %c0_i32 = arith.constant 0 : i32
    %c0_i32_0 = arith.constant 0 : i32
    return %c0_i32, %arg0 : i32, i32
  }
  func.func @transform_1(%arg0: i32) -> (i32, i32) {
    %c0_i32 = arith.constant 0 : i32
    %c0_i32_0 = arith.constant 0 : i32
    %c0_i32_1 = arith.constant 0 : i32
    return %c0_i32, %c0_i32_0 : i32, i32
  }
  func.func @transform_2(%arg0: i32) -> (i32, i32) {
    %c0_i32 = arith.constant 0 : i32
    %c0_i32_0 = arith.constant 0 : i32
    %c0_i32_1 = arith.constant 0 : i32
    return %c0_i32, %c0_i32_0 : i32, i32
  }
  func.func @transform_3(%arg0: i32) -> (i32, i32) {
    %c0_i32 = arith.constant 0 : i32
    %c0_i32_0 = arith.constant 0 : i32
    %c0_i32_1 = arith.constant 0 : i32
    return %c0_i32, %c0_i32_0 : i32, i32
  }
  func.func @transform_4(%arg0: i32) -> (i32, i32) {
    %c0_i32 = arith.constant 0 : i32
    %c0_i32_0 = arith.constant 0 : i32
    return %arg0, %c0_i32 : i32, i32
  }
}

</mosaic_0001>

<llo_original>
// kernel: time_encode.1
$region0: #{time_encode.1}
  #allocation0 [shape = 'u32[]', space=smem, size = 0x4, offset = 0x4, fixed_abs, tag = 'smem constant byte address 0x4 - core index']
  #allocation1 [shape = 'u32[72,128]{1,0:T(1,128)}', space=vmem, size = 0x9000, scoped, tag = 'internal scratch']
  %s0 = inlined_call_operand.vmem [shape: bf16[12,4], index: 0, kind: input, shape index: {}]
  %s1 = inlined_call_operand.vmem [shape: bf16[12,128], index: 1, kind: input, shape index: {}]
  %s2 = inlined_call_operand.vmem [shape: f32[1,128], index: 2, kind: input, shape index: {}]
  %s3 = inlined_call_operand.vmem [shape: f32[1,128], index: 3, kind: input, shape index: {}]
  %s4 = inlined_call_operand.vmem [shape: f32[4,128], index: 4, kind: output, shape index: {}]
  %s5 = sld [smem:[#allocation0]]
  $region26: #{time_encode.1} parent=0
    _
  %s7 = ssub.s32 1, %s5
  %s8 = scalar_select 0, %s7, %s5
  // Predicated region
  $region2: #{time_encode.1} parent=0 // pred_check
    _
  $region3: #{time_encode.1} parent=0 // pred_check_branch
    %10 = sbr.rel (0) target = $region5
  $region4: #{time_encode.1} parent=0 // pred_region
    _
  $region5: #{time_encode.1} parent=0 // pred_fallthru
    _
  // Predicated region
  $region6: #{time_encode.1} parent=0 // pred_check
    _
  $region7: #{time_encode.1} parent=0 // pred_check_branch
    %12 = sbr.rel (0) target = $region9
  $region8: #{time_encode.1} parent=0 // pred_region
    _
  $region9: #{time_encode.1} parent=0 // pred_fallthru
    _
  // Predicated region
  $region10: #{time_encode.1} parent=0 // pred_check
    _
  $region11: #{time_encode.1} parent=0 // pred_check_branch
    %14 = sbr.rel (0) target = $region13
  $region12: #{time_encode.1} parent=0 // pred_region
    _
  $region13: #{time_encode.1} parent=0 // pred_fallthru
    _
  // Predicated region
  $region14: #{time_encode.1} parent=0 // pred_check
    _
  $region15: #{time_encode.1} parent=0 // pred_check_branch
    %16 = sbr.rel (0) target = $region17
  $region16: #{time_encode.1} parent=0 // pred_region
    _
  $region17: #{time_encode.1} parent=0 // pred_fallthru
    _
  %v18 = vld [vmem:[%s0] sm:$0xf]
  %v19 = vld [vmem:[%s0 + $0x4] sm:$0x3]
  %v20 = vld [vmem:[%s1] sm:$0xf]
  %v21 = vld [vmem:[%s1 + $0x4] sm:$0x3]
  %v24 = vunpack.c.l.b16 %v18
  %v25 = vunpack.c.l.b16 %v19
  %v26 = vpack.c.b16 %v25, %v24
  %28 = vxpose.xlu0.c.b16.start [1/8] %v26, 128
  %29 = vxpose.xlu0.c.b16.cont [2/8] 0, 128
  %30 = vxpose.xlu0.c.b16.cont [3/8] 0, 128
  %31 = vxpose.xlu0.c.b16.cont [4/8] 0, 128
  %32 = vxpose.xlu0.c.b16.cont [5/8] 0, 128
  %33 = vxpose.xlu0.c.b16.cont [6/8] 0, 128
  %34 = vxpose.xlu0.c.b16.cont [7/8] 0, 128
  %35 = vxpose.xlu0.c.b16.end [8/8] 0, 128
  %v36 = vpop.trf.xlu0
  %v37 = vpop.trf.xlu0
  %v38 = vpop.trf.xlu0
  %v39 = vpop.trf.xlu0
  %v40 = vpop.trf.xlu0
  %v41 = vpop.trf.xlu0
  %v42 = vpop.trf.xlu0
  %v43 = vpop.trf.xlu0
  %v46 = vunpack.c.l.b16 %v20
  %v47 = vunpack.c.l.b16 %v21
  %v48 = vpack.c.b16 %v47, %v46
  %vm49 = vcmask 97280
  %v51 = vsel %vm49, %v36, 0
  %vm53 = vcmask 1045504
  %v55 = vsel %vm53, %v48, 0
  %57 = vmatpush.bf16.msra.mxu0 0
  %58 = vmatpush.bf16.msra.mxu0 0
  %59 = vmatpush.bf16.msra.mxu0 0
  %60 = vmatpush.bf16.msra.mxu0 0
  %61 = vmatpush.bf16.msra.mxu0 0
  %62 = vmatpush.bf16.msra.mxu0 0
  %63 = vmatpush.bf16.msra.mxu0 0
  %64 = vmatpush.bf16.msra.mxu0 %v55
  %65 = vmatmul.bf16.gmra.mxu0 %v51
  %v66 = vpop.f32.mrf.mxu0
  %v67 = vadd.f32 0.0, %v66
  %v68 = vpop.f32.mrf.mxu0
  %69 = vdwg.mxu0
  %v70 = vld [vmem:[%s2] sm:$0x1]
  %v72 = vperm.slane %v70, 0
  %v74 = vmul.f32 %v67, %v72
  %v75 = vld [vmem:[%s3] sm:$0x1]
  %v77 = vperm.slane %v75, 0
  %v79 = vadd.f32 %v74, %v77
  %v80 = vand.u32 2147483647, %v79
  %vm81 = vcmp.le.f32.partialorder %v80, 0.7853982
  %vm82 = vcmp.lt.s32.totalorder %v79, 0
  %v83 = vand.u32 %v79, 2139095040
  %v84 = vshrl.u32 %v83, 23
  %v85 = vsub.s32 %v84, 127
  %v86 = vand.u32 2147483647, %v79
  %v87 = vand.u32 %v86, 8388607
  %v88 = vor.u32 %v87, 8388608
  %v89 = vsub.s32 0, %v88
  %v90 = vadd.s32 %v85, 1
  %vm91 = vcmp.gt.s32.totalorder %v90, 0
  %v92 = vsel %vm91, %v90, 0
  %v93 = vshrl.u32 %v92, 5
  %v94 = vand.u32 %v92, 31
  %v95 = vsub.s32 32, %v94
  %v96 = vshrl.u32 683565275, %v95
  %v97 = vshll.u32 683565275, %v94
  %v98 = vshrl.u32 2475754826, %v95
  %v99 = vor.u32 %v97, %v98
  %v100 = vshll.u32 2475754826, %v94
  %v101 = vshrl.u32 2131351028, %v95
  %v102 = vor.u32 %v100, %v101
  %v103 = vshll.u32 2131351028, %v94
  %v104 = vshrl.u32 2102212464, %v95
  %v105 = vor.u32 %v103, %v104
  %v106 = vshll.u32 2102212464, %v94
  %v107 = vshrl.u32 920167782, %v95
  %v108 = vor.u32 %v106, %v107
  %v109 = vshll.u32 920167782, %v94
  %v110 = vshrl.u32 1326507024, %v95
  %v111 = vor.u32 %v109, %v110
  %vm112 = vcmp.lt.s32.totalorder %v93, 1
  %vm113 = vcmp.lt.s32.totalorder %v93, 2
  %vm114 = vcmp.lt.s32.totalorder %v93, 3
  %vm115 = vcmp.lt.s32.totalorder %v93, 4
  %v116 = vsel %vm112, %v96, %v99
  %v117 = vsel %vm115, %v105, 2102212464
  %v118 = vsel %vm114, %v102, %v117
  %v119 = vsel %vm113, %v116, %v118
  %v120 = vsel %vm112, %v99, %v102
  %v121 = vsel %vm115, %v108, 920167782
  %v122 = vsel %vm114, %v105, %v121
  %v123 = vsel %vm113, %v120, %v122
  %v124 = vsel %vm112, %v102, %v105
  %v125 = vsel %vm115, %v111, 1326507024
  %v126 = vsel %vm114, %v108, %v125
  %v127 = vsel %vm113, %v124, %v126
  %v128 = vshll.u32 %v88, 8
  %v129 = vand.u32 %v128, 65535
  %v130 = vshrl.u32 %v128, 16
  %v131 = vand.u32 %v127, 65535
  %v132 = vshrl.u32 %v127, 16
  %v133 = vmul.u32 %v129, %v131
  %v134 = vmul.u32 %v129, %v132
  %v135 = vmul.u32 %v130, %v131
  %v136 = vmul.u32 %v130, %v132
  %v137 = vshll.u32 %v134, 16
  %v138 = vshrl.u32 %v134, 16
  %v139 = vshll.u32 %v135, 16
  %v140 = vshrl.u32 %v135, 16
  %vm141 = vc.u32 %v133, %v137
  %v142 = vsel %vm141, 1, 0
  %v143 = vadd.s32 %v133, %v137
  %v144 = vadd.s32 %v136, %v142
  %vm145 = vc.u32 %v143, %v139
  %v146 = vsel %vm145, 1, 0
  %v147 = vadd.s32 %v143, %v139
  %v148 = vadd.s32 %v144, %v146
  %v149 = vadd.s32 %v148, %v138
  %v150 = vadd.s32 %v149, %v140
  %v151 = vand.u32 %v128, 65535
  %v152 = vshrl.u32 %v128, 16
  %v153 = vand.u32 %v123, 65535
  %v154 = vshrl.u32 %v123, 16
  %v155 = vmul.u32 %v151, %v153
  %v156 = vmul.u32 %v151, %v154
  %v157 = vmul.u32 %v152, %v153
  %v158 = vmul.u32 %v152, %v154
  %v159 = vshll.u32 %v156, 16
  %v160 = vshrl.u32 %v156, 16
  %v161 = vshll.u32 %v157, 16
  %v162 = vshrl.u32 %v157, 16
  %vm163 = vc.u32 %v155, %v159
  %v164 = vsel %vm163, 1, 0
  %v165 = vadd.s32 %v155, %v159
  %v166 = vadd.s32 %v158, %v164
  %vm167 = vc.u32 %v165, %v161
  %v168 = vsel %vm167, 1, 0
  %v169 = vadd.s32 %v165, %v161
  %v170 = vadd.s32 %v166, %v168
  %v171 = vadd.s32 %v170, %v160
  %v172 = vadd.s32 %v171, %v162
  %v173 = vmul.u32 %v128, %v119
  %v174 = vadd.s32 %v150, %v169
  %vm175 = vc.u32 %v150, %v169
  %v176 = vadd.s32 %v172, 1
  %v177 = vsel %vm175, %v176, %v172
  %v178 = vadd.s32 %v173, %v177
  %v179 = vadd.s32 %v178, 536870912
  %v180 = vshrl.u32 %v179, 30
  %v181 = vshll.u32 %v180, 30
  %v182 = vsub.s32 %v178, %v181
  %vm183 = vcmp.lt.s32.totalorder %v182, 0
  %v184 = vsub.s32 0, %v182
  %v185 = vsel %vm183, %v184, %v182
  %v186 = vclz %v185
  %v187 = vsub.s32 %v186, 2
  %vm188 = vcmp.gt.s32.totalorder 0, %v187
  %v189 = vsel %vm188, 0, %v187
  %v190 = vsub.s32 32, %v189
  %v191 = vshll.u32 %v182, %v189
  %v192 = vshrl.u32 %v174, %v190
  %v193 = vor.u32 %v191, %v192
  %v194 = vsub.s32 4294967266, %v189
  %v195 = vadd.s32 %v194, 127
  %v196 = vshll.u32 %v195, 23
  %v197 = vor.u32 4788187, %v196
  %v198 = vand.u32 2147483647, %v197
  %v200 = vcvt.s32.f32 %v193
  %v201 = vmul.f32 %v200, %v198
  %v202 = vxor.u32 %v201, 2147483648
  %v203 = vsel %vm82, %v202, %v201
  %v204 = vsub.s32 4, %v180
  %v205 = vsel %vm82, %v204, %v180
  %v206 = vsel %vm81, %v79, %v203
  %v207 = vsel %vm81, 0, %v205
  %v208 = vmul.f32 %v206, %v206
  %v209 = vmul.f32 %v208, -0.001358992
  %v210 = vadd.f32 %v209, 0.041655596
  %v211 = vmul.f32 %v208, %v210
  %v212 = vadd.f32 %v211, -0.4999988
  %v213 = vmul.f32 %v208, %v212
  %v214 = vadd.f32 1.0, %v213
  %v215 = vmul.f32 %v206, %v206
  %v216 = vmul.f32 %v215, -0.00019511016
  %v217 = vadd.f32 %v216, 0.008332121
  %v218 = vmul.f32 %v215, %v217
  %v219 = vadd.f32 %v218, -0.16666654
  %v220 = vmul.f32 %v215, %v219
  %v221 = vadd.f32 %v220, 1.0
  %v222 = vmul.f32 %v221, %v206
  %vm223 = vweird.f32 %v79
  %v224 = vand.u32 %v207, 3
  %vm225 = vcmp.lt.s32.totalorder %v224, 2
  %vm226 = vcmp.eq.s32.totalorder %v224, 0
  %v227 = vxor.u32 %v222, 2147483648
  %v228 = vsel %vm226, %v214, %v227
  %vm229 = vcmp.eq.s32.totalorder %v224, 2
  %v230 = vxor.u32 %v214, 2147483648
  %v231 = vsel %vm229, %v230, %v222
  %v232 = vsel %vm225, %v228, %v231
  %v233 = vsel %vm223, nan, %v232
  %234 = vst [vmem:[%s4] sm:$0xf] %v233
  // Predicated region
  $region18: #{time_encode.1} parent=0 // pred_check
    _
  $region19: #{time_encode.1} parent=0 // pred_check_branch
    %236 = sbr.rel (0) target = $region21
  $region20: #{time_encode.1} parent=0 // pred_region
    _
  $region21: #{time_encode.1} parent=0 // pred_fallthru
    _
  // Predicated region
  $region22: #{time_encode.1} parent=0 // pred_check
    _
  $region23: #{time_encode.1} parent=0 // pred_check_branch
    %238 = sbr.rel (0) target = $region25
  $region24: #{time_encode.1} parent=0 // pred_region
    _
  $region25: #{time_encode.1} parent=0 // pred_fallthru
    _

</llo_original>
